<compile_context>
chip_gen: v5e
topology: v5e:2x2
jax: 0.10.0
libtpu: 0.0.40
codegen_flags: <defaults>
</compile_context>

<pallas_src>
import functools

import jax
import jax.numpy as jnp
from jax.experimental import pallas as pl
from jax.experimental.pallas import tpu as pltpu


def _attn_map_row_quant_kernel(x_ref, o_ref, *, n_bits: int, sym: bool):
    """One block: shape (tb, N_q, tnk).

    Quant params are per key-token (per lane column), reduced over the query
    axis (axis=1 of the block) -- equivalent to PyTorch's 'row' group.
    Ragged tail blocks are safe: stats are per (slab, lane) column, so stale
    VMEM in padded rows/lanes never contaminates valid columns, and Pallas
    masks the out-of-range writeback.
    """
    x = x_ref[...]                                   # native I/O dtype
    if sym:
        qmax = float(2 ** (n_bits - 1) - 1)
        absmax = jnp.max(jnp.abs(x), axis=1, keepdims=True)        # (tb,1,tnk)
        delta = jnp.maximum(absmax.astype(jnp.float32), 1e-8) / qmax
        inv_delta = 1.0 / delta                      # once per lane column
        # |x| <= absmax => round(x*inv_delta) >= -qmax > -(qmax+1): the lower
        # clamp of [-2^(n-1), 2^(n-1)-1] can never bind -> single minimum.
        x_q = jnp.minimum(jnp.round(x.astype(jnp.float32) * inv_delta), qmax)
        o_ref[...] = (x_q * delta).astype(o_ref.dtype)
    else:
        qmax = float(2 ** n_bits - 1)
        x_max = jnp.max(x, axis=1, keepdims=True).astype(jnp.float32)
        x_min = jnp.min(x, axis=1, keepdims=True).astype(jnp.float32)
        delta = jnp.maximum(x_max - x_min, 1e-8) / qmax
        inv_delta = 1.0 / delta                      # once per lane column
        zp = jnp.round(-x_min * inv_delta)           # integer-valued per column
        # clip(r+zp, 0, qmax) - zp == clip(r, -zp, qmax-zp); the lower bound is
        # redundant: every valid x >= x_min (Nq never tiled), round monotone,
        # and round(x_min*inv_delta) == -zp exactly -> r >= -zp always.
        x_q = jnp.minimum(jnp.round(x.astype(jnp.float32) * inv_delta),
                          qmax - zp)
        o_ref[...] = (x_q * delta).astype(o_ref.dtype)


def _tpu_vmem_capacity_bytes() -> int:
    """Best-effort physical VMEM query; defaults to 128 MiB (v5e/v6e-class)."""
    try:
        info = pltpu.get_tpu_info()
        for attr in ("vmem_capacity_bytes", "vmem_bytes", "vmem_size_bytes"):
            v = getattr(info, attr, None)
            if v:
                return int(v)
    except Exception:
        pass
    try:
        kind = jax.devices()[0].device_kind.lower()
        if "v7" in kind:
            return 64 << 20
    except Exception:
        pass
    return 128 << 20


def _choose_tiles(bh, nq, nk, itemsize, block_budget_bytes, min_grid_blocks):
    """Pick (tb, tnk) so one (tb, nq, tnk) block is ~block_budget_bytes.

    Never tiles nq (the reduction axis).  Accepts ragged tail blocks rather
    than shrinking every block (Pallas masks invalid writeback)."""
    slab_bytes = nq * nk * itemsize
    if slab_bytes <= block_budget_bytes:
        # Whole Nk fits in one block: fuse (b, head) slabs; ragged tail OK.
        max_tb = max(1, block_budget_bytes // slab_bytes)
        if min_grid_blocks > 1:
            # Keep enough grid steps so both v7x TensorCores pipeline.
            max_tb = min(max_tb, max(1, bh // min_grid_blocks))
        return min(bh, max_tb), nk
    # A single (b, head) slab is too big: tile the lane (Nk) axis in multiples
    # of 128 with a floor of ~2 KiB contiguous per row (512 f32 / 1024 bf16
    # lanes) -- strided-DMA per-row overhead dominates below that.
    col_bytes = nq * itemsize
    tnk = (block_budget_bytes // col_bytes) // 128 * 128
    tnk_floor = max(128, (2048 // itemsize) // 128 * 128)
    tnk = max(tnk, tnk_floor)
    tnk = min(tnk, nk)
    return 1, tnk


def quantized_attention_map_opensora(
    x: jax.Array,
    *,
    n_bits: int = 8,
    sym: bool = False,
    group: str = "row",
    quant_mode: bool = True,
    cross_attn: bool = False,
    block_budget_bytes: int | None = None,
    donate_input: bool = False,
) -> jax.Array:
    """Forward pass of QuantizedAttentionMapOpenSORA.

    x: [BS, N_head, N_q, N_k]  (self-attn: N_q == N_k; cross-attn:
       N_q = N_image_token, N_k = N_text_token).  Output has same shape/dtype.
    """
    del cross_attn  # 'row' path is shape-agnostic; reduction axis is identical.
    if not quant_mode:
        return x
    if group != "row":
        # TODO(synk): 'block' group needs externally-loaded reorder tables.
        raise NotImplementedError("only group='row' is implemented")

    B, H, Nq, Nk = x.shape
    BH = B * H
    itemsize = jnp.dtype(x.dtype).itemsize

    vmem_cap = _tpu_vmem_capacity_bytes()
    is_v7x_like = vmem_cap <= (80 << 20)           # 64 MiB-VMEM generation
    if block_budget_bytes is None:
        block_budget_bytes = (5 << 20) if is_v7x_like else (8 << 20)
    min_grid_blocks = 8 if is_v7x_like else 1

    tb, tnk = _choose_tiles(BH, Nq, Nk, itemsize, block_budget_bytes,
                            min_grid_blocks)
    grid = (pl.cdiv(BH, tb), pl.cdiv(Nk, tnk))

    # VMEM: in/out buffering + f32 compute temporaries + headroom; cap per gen.
    block_bytes = tb * Nq * tnk * itemsize
    f32_block_bytes = tb * Nq * tnk * 4
    use_buffered3 = is_v7x_like and hasattr(pl, "Buffered")
    n_in_bufs = 3 if use_buffered3 else 2
    vmem_need = (n_in_bufs + 2) * block_bytes + 2 * f32_block_bytes + (4 << 20)
    vmem_cap_limit = (48 << 20) if is_v7x_like else (100 << 20)
    vmem_limit = int(min(max(32 << 20, vmem_need), vmem_cap_limit))

    idx_map = lambda i, j: (i, 0, j)
    in_spec = pl.BlockSpec((tb, Nq, tnk), idx_map)
    if use_buffered3:
        try:  # 3-deep input pipeline hides DMA jitter on v7x (compute ~= DMA).
            in_spec = pl.BlockSpec((tb, Nq, tnk), idx_map,
                                   pipeline_mode=pl.Buffered(3))
        except TypeError:
            in_spec = pl.BlockSpec((tb, Nq, tnk), idx_map)

    total = BH * Nq * Nk
    cost = pl.CostEstimate(
        flops=7 * total, transcendentals=0, bytes_accessed=2 * total * itemsize
    )

    x2 = x.reshape(BH, Nq, Nk)
    out = pl.pallas_call(
        functools.partial(_attn_map_row_quant_kernel, n_bits=n_bits, sym=sym),
        out_shape=jax.ShapeDtypeStruct((BH, Nq, Nk), x.dtype),
        grid_spec=pltpu.PrefetchScalarGridSpec(
            num_scalar_prefetch=0,
            grid=grid,
            in_specs=[in_spec],
            out_specs=pl.BlockSpec((tb, Nq, tnk), idx_map),
        ),
        compiler_params=pltpu.CompilerParams(
            dimension_semantics=("parallel", "parallel"),
            vmem_limit_bytes=vmem_limit,
        ),
        # Only alias when the caller guarantees x is dead afterwards; otherwise
        # XLA would insert a defensive full copy (extra HBM read+write).
        input_output_aliases=({0: 0} if donate_input else {}),
        cost_estimate=cost,
    )(x2)
    return out.reshape(B, H, Nq, Nk)


def _reference_row_quant(x, n_bits=8, sym=False):
    """Pure-JAX mirror of the PyTorch 'row' path (permute/reshape/quant).

    Uses the same hoisted reciprocal as the kernel; vs. a literal per-element
    divide this can differ by at most 1 LSB at exact bin boundaries (same
    magnitude as cross-framework rounding noise).
    """
    B, H, Nq, Nk = x.shape
    xt = jnp.transpose(x, (0, 1, 3, 2)).reshape(-1, Nq).astype(jnp.float32)
    if sym:
        qmax = float(2 ** (n_bits - 1) - 1)
        absmax = jnp.max(jnp.abs(xt), axis=-1, keepdims=True)
        delta = jnp.maximum(absmax, 1e-8) / qmax
        inv_delta = 1.0 / delta
        xq = jnp.clip(jnp.round(xt * inv_delta), -qmax - 1.0, qmax) * delta
    else:
        qmax = float(2 ** n_bits - 1)
        x_max = jnp.max(xt, axis=-1, keepdims=True)
        x_min = jnp.min(xt, axis=-1, keepdims=True)
        delta = jnp.maximum(x_max - x_min, 1e-8) / qmax
        inv_delta = 1.0 / delta
        zp = jnp.round(-x_min * inv_delta)
        xq = (jnp.clip(jnp.round(xt * inv_delta) + zp, 0.0, qmax) - zp) * delta
    xq = xq.reshape(B, H, Nk, Nq)
    return jnp.transpose(xq, (0, 1, 3, 2)).astype(x.dtype)


if __name__ == "__main__":
    key = jax.random.PRNGKey(0)
    k1, k2, k3 = jax.random.split(key, 3)

    # Self-attention map: [BS, N_head, N_token, N_token]
    logits_self = jax.random.normal(k1, (2, 4, 128, 128), dtype=jnp.float32)
    x_self = jax.nn.softmax(logits_self, axis=-1)
    # Cross-attention map: [BS, N_head, N_image_token, N_text_token]
    logits_cross = jax.random.normal(k2, (2, 4, 128, 64), dtype=jnp.float32)
    x_cross = jax.nn.softmax(logits_cross, axis=-1)
    # bf16 / symmetric path (exercises bf16 HBM I/O + bf16 reductions).
    x_bf16 = x_self.astype(jnp.bfloat16)
    # Raw (signed) values with a non-divisor Nk: exercises the ragged lane-tile
    # path, negative x_min, and the folded-zero-point lower-bound argument.
    x_neg = jax.random.normal(k3, (1, 2, 256, 640), dtype=jnp.float32)

    # References first (kernel runs are alias-free in this test harness).
    ref_self = _reference_row_quant(x_self, n_bits=8, sym=False)
    ref_cross = _reference_row_quant(x_cross, n_bits=8, sym=False)
    ref_bf16 = _reference_row_quant(x_bf16, n_bits=8, sym=True)
    ref_neg = _reference_row_quant(x_neg, n_bits=8, sym=False)

    out_self = quantized_attention_map_opensora(x_self, n_bits=8, sym=False)
    out_cross = quantized_attention_map_opensora(
        x_cross, n_bits=8, sym=False, cross_attn=True
    )
    out_bf16 = quantized_attention_map_opensora(x_bf16, n_bits=8, sym=True)
    # Force a ragged tb tail (BH=8, tb=3 on 128-MiB-VMEM parts).
    out_ragged_tb = quantized_attention_map_opensora(
        x_self, n_bits=8, sym=False, block_budget_bytes=192 << 10
    )
    # Force lane-axis tiling with a ragged last lane block (tnk=512, Nk=640).
    out_neg = quantized_attention_map_opensora(
        x_neg, n_bits=8, sym=False, block_budget_bytes=256 << 10
    )
    jax.block_until_ready((out_self, out_cross, out_bf16, out_ragged_tb, out_neg))

    assert out_self.shape == x_self.shape and out_self.dtype == x_self.dtype
    assert out_cross.shape == x_cross.shape and out_cross.dtype == x_cross.dtype
    assert out_bf16.shape == x_bf16.shape and out_bf16.dtype == x_bf16.dtype
    assert out_neg.shape == x_neg.shape and out_neg.dtype == x_neg.dtype
    assert jnp.allclose(out_self, ref_self, atol=1e-6, rtol=1e-6)
    assert jnp.allclose(out_cross, ref_cross, atol=1e-6, rtol=1e-6)
    assert jnp.allclose(out_ragged_tb, ref_self, atol=1e-6, rtol=1e-6)
    assert jnp.allclose(out_neg, ref_neg, atol=1e-5, rtol=1e-5)
    assert jnp.allclose(
        out_bf16.astype(jnp.float32), ref_bf16.astype(jnp.float32),
        atol=1e-6, rtol=1e-6,
    )

    print("KERNEL_OK")
</pallas_src>

<mosaic_0001>
module attributes {stable_mosaic.version = 11 : i64} {
  func.func @_attn_map_row_quant_kernel(%arg0: i32, %arg1: i32, %arg2: memref<8x128x128xf32, #tpu.memory_space<vmem>>, %arg3: memref<8x128x128xf32, #tpu.memory_space<vmem>>) attributes {dimension_semantics = [#tpu.dimension_semantics<parallel>, #tpu.dimension_semantics<parallel>], iteration_bounds = array<i64: 1, 1>, scalar_prefetch = 0 : i64, scratch_operands = 0 : i64, tpu.core_type = #tpu.core_type<tc>, window_params = [{transform_indices = @transform_0, window_bounds = array<i64: 8, 128, 128>}, {transform_indices = @transform_1, window_bounds = array<i64: 8, 128, 128>}]} {
    %c0 = arith.constant 0 : index
    %c0_0 = arith.constant 0 : index
    %c0_1 = arith.constant 0 : index
    %0 = vector.load %arg2[%c0, %c0_0, %c0_1] : memref<8x128x128xf32, #tpu.memory_space<vmem>>, vector<8x128x128xf32>
    %cst = arith.constant dense<0xFF800000> : vector<8x128xf32>
    %1 = vector.multi_reduction <maximumf>, %0, %cst [1] : vector<8x128x128xf32> to vector<8x128xf32>
    %2 = vector.shape_cast %1 : vector<8x128xf32> to vector<8x1x128xf32>
    %cst_2 = arith.constant dense<0x7F800000> : vector<8x128xf32>
    %3 = vector.multi_reduction <minimumf>, %0, %cst_2 [1] : vector<8x128x128xf32> to vector<8x128xf32>
    %4 = vector.shape_cast %3 : vector<8x128xf32> to vector<8x1x128xf32>
    %5 = arith.subf %2, %4 : vector<8x1x128xf32>
    %cst_3 = arith.constant 9.99999993E-9 : f32
    %6 = vector.broadcast %cst_3 : f32 to vector<8x1x128xf32>
    %7 = arith.maximumf %5, %6 : vector<8x1x128xf32>
    %cst_4 = arith.constant 2.550000e+02 : f32
    %8 = vector.broadcast %cst_4 : f32 to vector<8x1x128xf32>
    %9 = arith.divf %7, %8 : vector<8x1x128xf32>
    %cst_5 = arith.constant 1.000000e+00 : f32
    %10 = vector.broadcast %cst_5 : f32 to vector<8x1x128xf32>
    %11 = arith.divf %10, %9 : vector<8x1x128xf32>
    %cst_6 = arith.constant 0.000000e+00 : f32
    %12 = vector.broadcast %cst_6 : f32 to vector<8x1x128xf32>
    %13 = arith.subf %12, %4 : vector<8x1x128xf32>
    %14 = arith.mulf %13, %11 : vector<8x1x128xf32>
    %15 = math.roundeven %14 : vector<8x1x128xf32>
    %16 = vector.broadcast %11 : vector<8x1x128xf32> to vector<8x128x128xf32>
    %17 = arith.mulf %0, %16 : vector<8x128x128xf32>
    %18 = math.roundeven %17 : vector<8x128x128xf32>
    %cst_7 = arith.constant 2.550000e+02 : f32
    %19 = vector.broadcast %cst_7 : f32 to vector<8x1x128xf32>
    %20 = arith.subf %19, %15 : vector<8x1x128xf32>
    %21 = vector.broadcast %20 : vector<8x1x128xf32> to vector<8x128x128xf32>
    %22 = arith.minimumf %18, %21 : vector<8x128x128xf32>
    %23 = vector.broadcast %9 : vector<8x1x128xf32> to vector<8x128x128xf32>
    %24 = arith.mulf %22, %23 : vector<8x128x128xf32>
    %c0_8 = arith.constant 0 : index
    %c0_9 = arith.constant 0 : index
    %c0_10 = arith.constant 0 : index
    %25 = vector.load %arg3[%c0_8, %c0_9, %c0_10] : memref<8x128x128xf32, #tpu.memory_space<vmem>>, vector<8x128x128xf32>
    tpu.vector_store %arg3[%c0_8, %c0_9, %c0_10], %24 {strides = array<i32>} : memref<8x128x128xf32, #tpu.memory_space<vmem>>, vector<8x128x128xf32>,
    return
  }
  func.func @transform_0(%arg0: i32, %arg1: i32) -> (i32, i32, i32) {
    %c0_i32 = arith.constant 0 : i32
    %c0_i32_0 = arith.constant 0 : i32
    return %arg0, %c0_i32, %arg1 : i32, i32, i32
  }
  func.func @transform_1(%arg0: i32, %arg1: i32) -> (i32, i32, i32) {
    %c0_i32 = arith.constant 0 : i32
    %c0_i32_0 = arith.constant 0 : i32
    return %arg0, %c0_i32, %arg1 : i32, i32, i32
  }
}

</mosaic_0001>

<llo_original>
// kernel: tpu_custom_call.1
$region0: #{tpu_custom_call.1}
  #allocation0 [shape = 'u32[]', space=smem, size = 0x4, offset = 0x4, fixed_abs, tag = 'smem constant byte address 0x4 - core index']
  #allocation1 [shape = 'u32[72,128]{1,0:T(1,128)}', space=vmem, size = 0x9000, scoped, tag = 'internal scratch']
  %s0 = inlined_call_operand.hbm [shape: f32[8,128,128], index: 0, kind: input, shape index: {}]
  %s1 = inlined_call_operand.hbm [shape: f32[8,128,128], index: 1, kind: output, shape index: {}]
  %s2 = sld [smem:[#allocation0]]
  $region18: #{tpu_custom_call.1} parent=0
    _
  %s4 = ssub.s32 1, %s2
  %s5 = scalar_select 0, %s4, %s2
  $region1: #{tpu_custom_call.1} parent=0
    #allocation2 [shape = 'u8[524288]{0}', space=vmem, size = 0x80000, scoped, tag = 'input window, operand 0, single buffered']
    #allocation3 [shape = 's32[1]{0}', space=sflag, size = 0x4, scoped, tag = 'scoped memory for tpu_custom_call.1']
    #allocation4 [shape = 's32[1]{0}', space=sflag, size = 0x4, scoped, tag = 'scoped memory for tpu_custom_call.1']
    #allocation5 [shape = 'u8[524288]{0}', space=vmem, size = 0x80000, scoped, tag = 'output window, operand 0, single buffered']
    %6 = vsyncpa [#allocation3], 0
    %7 = vsyncpa [#allocation4], 0
    // Predicated region
    $region2: #{tpu_custom_call.1} parent=1 // pred_check
      _
    $region3: #{tpu_custom_call.1} parent=1 // pred_check_branch
      %9 = sbr.rel (0) target = $region5
    $region4: #{tpu_custom_call.1} parent=1 // pred_region
      %11 = vsyncadd [#allocation3], 0
      %s12 = sshll.u32 %s0, 4
      %s13 = int_to_ptr.hbm [resolvable:$true] %s12
      %s14 = sshll.u32 [#allocation2], 4
      %s15 = int_to_ptr.vmem [resolvable:$true] %s14
      %20 = dma.hbm_to_vmem [thread:$0]  %s13, 16384, %s15, [#allocation3], 128, 128, 8
    $region5: #{tpu_custom_call.1} parent=1 // pred_fallthru
      _
    // Predicated region
    $region6: #{tpu_custom_call.1} parent=1 // pred_check
      _
    $region7: #{tpu_custom_call.1} parent=1 // pred_check_branch
      %22 = sbr.rel (0) target = $region9
    $region8: #{tpu_custom_call.1} parent=1 // pred_region
      %24 = dma.done [#allocation3], 16384
    $region9: #{tpu_custom_call.1} parent=1 // pred_fallthru
      _
    %v25 = vld [vmem:[#allocation2] sm:$0xff]
    %v26 = vld [vmem:[#allocation2 + $0x8] sm:$0xff]
    %v27 = vld [vmem:[#allocation2 + $0x10] sm:$0xff]
    %v28 = vld [vmem:[#allocation2 + $0x18] sm:$0xff]
    %v29 = vld [vmem:[#allocation2 + $0x20] sm:$0xff]
    %v30 = vld [vmem:[#allocation2 + $0x28] sm:$0xff]
    %v31 = vld [vmem:[#allocation2 + $0x30] sm:$0xff]
    %v32 = vld [vmem:[#allocation2 + $0x38] sm:$0xff]
    %v33 = vld [vmem:[#allocation2 + $0x40] sm:$0xff]
    %v34 = vld [vmem:[#allocation2 + $0x48] sm:$0xff]
    %v35 = vld [vmem:[#allocation2 + $0x50] sm:$0xff]
    %v36 = vld [vmem:[#allocation2 + $0x58] sm:$0xff]
    %v37 = vld [vmem:[#allocation2 + $0x60] sm:$0xff]
    %v38 = vld [vmem:[#allocation2 + $0x68] sm:$0xff]
    %v39 = vld [vmem:[#allocation2 + $0x70] sm:$0xff]
    %v40 = vld [vmem:[#allocation2 + $0x78] sm:$0xff]
    %v41 = vld [vmem:[#allocation2 + $0x80] sm:$0xff]
    %v42 = vld [vmem:[#allocation2 + $0x88] sm:$0xff]
    %v43 = vld [vmem:[#allocation2 + $0x90] sm:$0xff]
    %v44 = vld [vmem:[#allocation2 + $0x98] sm:$0xff]
    %v45 = vld [vmem:[#allocation2 + $0xa0] sm:$0xff]
    %v46 = vld [vmem:[#allocation2 + $0xa8] sm:$0xff]
    %v47 = vld [vmem:[#allocation2 + $0xb0] sm:$0xff]
    %v48 = vld [vmem:[#allocation2 + $0xb8] sm:$0xff]
    %v49 = vld [vmem:[#allocation2 + $0xc0] sm:$0xff]
    %v50 = vld [vmem:[#allocation2 + $0xc8] sm:$0xff]
    %v51 = vld [vmem:[#allocation2 + $0xd0] sm:$0xff]
    %v52 = vld [vmem:[#allocation2 + $0xd8] sm:$0xff]
    %v53 = vld [vmem:[#allocation2 + $0xe0] sm:$0xff]
    %v54 = vld [vmem:[#allocation2 + $0xe8] sm:$0xff]
    %v55 = vld [vmem:[#allocation2 + $0xf0] sm:$0xff]
    %v56 = vld [vmem:[#allocation2 + $0xf8] sm:$0xff]
    %v57 = vld [vmem:[#allocation2 + $0x100] sm:$0xff]
    %v58 = vld [vmem:[#allocation2 + $0x108] sm:$0xff]
    %v59 = vld [vmem:[#allocation2 + $0x110] sm:$0xff]
    %v60 = vld [vmem:[#allocation2 + $0x118] sm:$0xff]
    %v61 = vld [vmem:[#allocation2 + $0x120] sm:$0xff]
    %v62 = vld [vmem:[#allocation2 + $0x128] sm:$0xff]
    %v63 = vld [vmem:[#allocation2 + $0x130] sm:$0xff]
    %v64 = vld [vmem:[#allocation2 + $0x138] sm:$0xff]
    %v65 = vld [vmem:[#allocation2 + $0x140] sm:$0xff]
    %v66 = vld [vmem:[#allocation2 + $0x148] sm:$0xff]
    %v67 = vld [vmem:[#allocation2 + $0x150] sm:$0xff]
    %v68 = vld [vmem:[#allocation2 + $0x158] sm:$0xff]
    %v69 = vld [vmem:[#allocation2 + $0x160] sm:$0xff]
    %v70 = vld [vmem:[#allocation2 + $0x168] sm:$0xff]
    %v71 = vld [vmem:[#allocation2 + $0x170] sm:$0xff]
    %v72 = vld [vmem:[#allocation2 + $0x178] sm:$0xff]
    %v73 = vld [vmem:[#allocation2 + $0x180] sm:$0xff]
    %v74 = vld [vmem:[#allocation2 + $0x188] sm:$0xff]
    %v75 = vld [vmem:[#allocation2 + $0x190] sm:$0xff]
    %v76 = vld [vmem:[#allocation2 + $0x198] sm:$0xff]
    %v77 = vld [vmem:[#allocation2 + $0x1a0] sm:$0xff]
    %v78 = vld [vmem:[#allocation2 + $0x1a8] sm:$0xff]
    %v79 = vld [vmem:[#allocation2 + $0x1b0] sm:$0xff]
    %v80 = vld [vmem:[#allocation2 + $0x1b8] sm:$0xff]
    %v81 = vld [vmem:[#allocation2 + $0x1c0] sm:$0xff]
    %v82 = vld [vmem:[#allocation2 + $0x1c8] sm:$0xff]
    %v83 = vld [vmem:[#allocation2 + $0x1d0] sm:$0xff]
    %v84 = vld [vmem:[#allocation2 + $0x1d8] sm:$0xff]
    %v85 = vld [vmem:[#allocation2 + $0x1e0] sm:$0xff]
    %v86 = vld [vmem:[#allocation2 + $0x1e8] sm:$0xff]
    %v87 = vld [vmem:[#allocation2 + $0x1f0] sm:$0xff]
    %v88 = vld [vmem:[#allocation2 + $0x1f8] sm:$0xff]
    %v89 = vld [vmem:[#allocation2 + $0x200] sm:$0xff]
    %v90 = vld [vmem:[#allocation2 + $0x208] sm:$0xff]
    %v91 = vld [vmem:[#allocation2 + $0x210] sm:$0xff]
    %v92 = vld [vmem:[#allocation2 + $0x218] sm:$0xff]
    %v93 = vld [vmem:[#allocation2 + $0x220] sm:$0xff]
    %v94 = vld [vmem:[#allocation2 + $0x228] sm:$0xff]
    %v95 = vld [vmem:[#allocation2 + $0x230] sm:$0xff]
    %v96 = vld [vmem:[#allocation2 + $0x238] sm:$0xff]
    %v97 = vld [vmem:[#allocation2 + $0x240] sm:$0xff]
    %v98 = vld [vmem:[#allocation2 + $0x248] sm:$0xff]
    %v99 = vld [vmem:[#allocation2 + $0x250] sm:$0xff]
    %v100 = vld [vmem:[#allocation2 + $0x258] sm:$0xff]
    %v101 = vld [vmem:[#allocation2 + $0x260] sm:$0xff]
    %v102 = vld [vmem:[#allocation2 + $0x268] sm:$0xff]
    %v103 = vld [vmem:[#allocation2 + $0x270] sm:$0xff]
    %v104 = vld [vmem:[#allocation2 + $0x278] sm:$0xff]
    %v105 = vld [vmem:[#allocation2 + $0x280] sm:$0xff]
    %v106 = vld [vmem:[#allocation2 + $0x288] sm:$0xff]
    %v107 = vld [vmem:[#allocation2 + $0x290] sm:$0xff]
    %v108 = vld [vmem:[#allocation2 + $0x298] sm:$0xff]
    %v109 = vld [vmem:[#allocation2 + $0x2a0] sm:$0xff]
    %v110 = vld [vmem:[#allocation2 + $0x2a8] sm:$0xff]
    %v111 = vld [vmem:[#allocation2 + $0x2b0] sm:$0xff]
    %v112 = vld [vmem:[#allocation2 + $0x2b8] sm:$0xff]
    %v113 = vld [vmem:[#allocation2 + $0x2c0] sm:$0xff]
    %v114 = vld [vmem:[#allocation2 + $0x2c8] sm:$0xff]
    %v115 = vld [vmem:[#allocation2 + $0x2d0] sm:$0xff]
    %v116 = vld [vmem:[#allocation2 + $0x2d8] sm:$0xff]
    %v117 = vld [vmem:[#allocation2 + $0x2e0] sm:$0xff]
    %v118 = vld [vmem:[#allocation2 + $0x2e8] sm:$0xff]
    %v119 = vld [vmem:[#allocation2 + $0x2f0] sm:$0xff]
    %v120 = vld [vmem:[#allocation2 + $0x2f8] sm:$0xff]
    %v121 = vld [vmem:[#allocation2 + $0x300] sm:$0xff]
    %v122 = vld [vmem:[#allocation2 + $0x308] sm:$0xff]
    %v123 = vld [vmem:[#allocation2 + $0x310] sm:$0xff]
    %v124 = vld [vmem:[#allocation2 + $0x318] sm:$0xff]
    %v125 = vld [vmem:[#allocation2 + $0x320] sm:$0xff]
    %v126 = vld [vmem:[#allocation2 + $0x328] sm:$0xff]
    %v127 = vld [vmem:[#allocation2 + $0x330] sm:$0xff]
    %v128 = vld [vmem:[#allocation2 + $0x338] sm:$0xff]
    %v129 = vld [vmem:[#allocation2 + $0x340] sm:$0xff]
    %v130 = vld [vmem:[#allocation2 + $0x348] sm:$0xff]
    %v131 = vld [vmem:[#allocation2 + $0x350] sm:$0xff]
    %v132 = vld [vmem:[#allocation2 + $0x358] sm:$0xff]
    %v133 = vld [vmem:[#allocation2 + $0x360] sm:$0xff]
    %v134 = vld [vmem:[#allocation2 + $0x368] sm:$0xff]
    %v135 = vld [vmem:[#allocation2 + $0x370] sm:$0xff]
    %v136 = vld [vmem:[#allocation2 + $0x378] sm:$0xff]
    %v137 = vld [vmem:[#allocation2 + $0x380] sm:$0xff]
    %v138 = vld [vmem:[#allocation2 + $0x388] sm:$0xff]
    %v139 = vld [vmem:[#allocation2 + $0x390] sm:$0xff]
    %v140 = vld [vmem:[#allocation2 + $0x398] sm:$0xff]
    %v141 = vld [vmem:[#allocation2 + $0x3a0] sm:$0xff]
    %v142 = vld [vmem:[#allocation2 + $0x3a8] sm:$0xff]
    %v143 = vld [vmem:[#allocation2 + $0x3b0] sm:$0xff]
    %v144 = vld [vmem:[#allocation2 + $0x3b8] sm:$0xff]
    %v145 = vld [vmem:[#allocation2 + $0x3c0] sm:$0xff]
    %v146 = vld [vmem:[#allocation2 + $0x3c8] sm:$0xff]
    %v147 = vld [vmem:[#allocation2 + $0x3d0] sm:$0xff]
    %v148 = vld [vmem:[#allocation2 + $0x3d8] sm:$0xff]
    %v149 = vld [vmem:[#allocation2 + $0x3e0] sm:$0xff]
    %v150 = vld [vmem:[#allocation2 + $0x3e8] sm:$0xff]
    %v151 = vld [vmem:[#allocation2 + $0x3f0] sm:$0xff]
    %v152 = vld [vmem:[#allocation2 + $0x3f8] sm:$0xff]
    %v153 = vmax.f32 %v25, %v26
    %v154 = vmax.f32 %v153, %v27
    %v155 = vmax.f32 %v154, %v28
    %v156 = vmax.f32 %v155, %v29
    %v157 = vmax.f32 %v156, %v30
    %v158 = vmax.f32 %v157, %v31
    %v159 = vmax.f32 %v158, %v32
    %v160 = vmax.f32 %v159, %v33
    %v161 = vmax.f32 %v160, %v34
    %v162 = vmax.f32 %v161, %v35
    %v163 = vmax.f32 %v162, %v36
    %v164 = vmax.f32 %v163, %v37
    %v165 = vmax.f32 %v164, %v38
    %v166 = vmax.f32 %v165, %v39
    %v167 = vmax.f32 %v166, %v40
    %v168 = vrot.slane %v167, 4
    %v169 = vmax.f32 %v167, %v168
    %v170 = vrot.slane %v169, 2
    %v171 = vmax.f32 %v169, %v170
    %v172 = vrot.slane %v171, 1
    %v173 = vmax.f32 %v171, %v172
    %v174 = vmax.f32 %v41, %v42
    %v175 = vmax.f32 %v174, %v43
    %v176 = vmax.f32 %v175, %v44
    %v177 = vmax.f32 %v176, %v45
    %v178 = vmax.f32 %v177, %v46
    %v179 = vmax.f32 %v178, %v47
    %v180 = vmax.f32 %v179, %v48
    %v181 = vmax.f32 %v180, %v49
    %v182 = vmax.f32 %v181, %v50
    %v183 = vmax.f32 %v182, %v51
    %v184 = vmax.f32 %v183, %v52
    %v185 = vmax.f32 %v184, %v53
    %v186 = vmax.f32 %v185, %v54
    %v187 = vmax.f32 %v186, %v55
    %v188 = vmax.f32 %v187, %v56
    %v189 = vrot.slane %v188, 4
    %v190 = vmax.f32 %v188, %v189
    %v191 = vrot.slane %v190, 2
    %v192 = vmax.f32 %v190, %v191
    %v193 = vrot.slane %v192, 1
    %v194 = vmax.f32 %v192, %v193
    %v195 = vmax.f32 %v57, %v58
    %v196 = vmax.f32 %v195, %v59
    %v197 = vmax.f32 %v196, %v60
    %v198 = vmax.f32 %v197, %v61
    %v199 = vmax.f32 %v198, %v62
    %v200 = vmax.f32 %v199, %v63
    %v201 = vmax.f32 %v200, %v64
    %v202 = vmax.f32 %v201, %v65
    %v203 = vmax.f32 %v202, %v66
    %v204 = vmax.f32 %v203, %v67
    %v205 = vmax.f32 %v204, %v68
    %v206 = vmax.f32 %v205, %v69
    %v207 = vmax.f32 %v206, %v70
    %v208 = vmax.f32 %v207, %v71
    %v209 = vmax.f32 %v208, %v72
    %v210 = vrot.slane %v209, 4
    %v211 = vmax.f32 %v209, %v210
    %v212 = vrot.slane %v211, 2
    %v213 = vmax.f32 %v211, %v212
    %v214 = vrot.slane %v213, 1
    %v215 = vmax.f32 %v213, %v214
    %v216 = vmax.f32 %v73, %v74
    %v217 = vmax.f32 %v216, %v75
    %v218 = vmax.f32 %v217, %v76
    %v219 = vmax.f32 %v218, %v77
    %v220 = vmax.f32 %v219, %v78
    %v221 = vmax.f32 %v220, %v79
    %v222 = vmax.f32 %v221, %v80
    %v223 = vmax.f32 %v222, %v81
    %v224 = vmax.f32 %v223, %v82
    %v225 = vmax.f32 %v224, %v83
    %v226 = vmax.f32 %v225, %v84
    %v227 = vmax.f32 %v226, %v85
    %v228 = vmax.f32 %v227, %v86
    %v229 = vmax.f32 %v228, %v87
    %v230 = vmax.f32 %v229, %v88
    %v231 = vrot.slane %v230, 4
    %v232 = vmax.f32 %v230, %v231
    %v233 = vrot.slane %v232, 2
    %v234 = vmax.f32 %v232, %v233
    %v235 = vrot.slane %v234, 1
    %v236 = vmax.f32 %v234, %v235
    %v237 = vmax.f32 %v89, %v90
    %v238 = vmax.f32 %v237, %v91
    %v239 = vmax.f32 %v238, %v92
    %v240 = vmax.f32 %v239, %v93
    %v241 = vmax.f32 %v240, %v94
    %v242 = vmax.f32 %v241, %v95
    %v243 = vmax.f32 %v242, %v96
    %v244 = vmax.f32 %v243, %v97
    %v245 = vmax.f32 %v244, %v98
    %v246 = vmax.f32 %v245, %v99
    %v247 = vmax.f32 %v246, %v100
    %v248 = vmax.f32 %v247, %v101
    %v249 = vmax.f32 %v248, %v102
    %v250 = vmax.f32 %v249, %v103
    %v251 = vmax.f32 %v250, %v104
    %v252 = vrot.slane %v251, 4
    %v253 = vmax.f32 %v251, %v252
    %v254 = vrot.slane %v253, 2
    %v255 = vmax.f32 %v253, %v254
    %v256 = vrot.slane %v255, 1
    %v257 = vmax.f32 %v255, %v256
    %v258 = vmax.f32 %v105, %v106
    %v259 = vmax.f32 %v258, %v107
    %v260 = vmax.f32 %v259, %v108
    %v261 = vmax.f32 %v260, %v109
    %v262 = vmax.f32 %v261, %v110
    %v263 = vmax.f32 %v262, %v111
    %v264 = vmax.f32 %v263, %v112
    %v265 = vmax.f32 %v264, %v113
    %v266 = vmax.f32 %v265, %v114
    %v267 = vmax.f32 %v266, %v115
    %v268 = vmax.f32 %v267, %v116
    %v269 = vmax.f32 %v268, %v117
    %v270 = vmax.f32 %v269, %v118
    %v271 = vmax.f32 %v270, %v119
    %v272 = vmax.f32 %v271, %v120
    %v273 = vrot.slane %v272, 4
    %v274 = vmax.f32 %v272, %v273
    %v275 = vrot.slane %v274, 2
    %v276 = vmax.f32 %v274, %v275
    %v277 = vrot.slane %v276, 1
    %v278 = vmax.f32 %v276, %v277
    %v279 = vmax.f32 %v121, %v122
    %v280 = vmax.f32 %v279, %v123
    %v281 = vmax.f32 %v280, %v124
    %v282 = vmax.f32 %v281, %v125
    %v283 = vmax.f32 %v282, %v126
    %v284 = vmax.f32 %v283, %v127
    %v285 = vmax.f32 %v284, %v128
    %v286 = vmax.f32 %v285, %v129
    %v287 = vmax.f32 %v286, %v130
    %v288 = vmax.f32 %v287, %v131
    %v289 = vmax.f32 %v288, %v132
    %v290 = vmax.f32 %v289, %v133
    %v291 = vmax.f32 %v290, %v134
    %v292 = vmax.f32 %v291, %v135
    %v293 = vmax.f32 %v292, %v136
    %v294 = vrot.slane %v293, 4
    %v295 = vmax.f32 %v293, %v294
    %v296 = vrot.slane %v295, 2
    %v297 = vmax.f32 %v295, %v296
    %v298 = vrot.slane %v297, 1
    %v299 = vmax.f32 %v297, %v298
    %v300 = vmax.f32 %v137, %v138
    %v301 = vmax.f32 %v300, %v139
    %v302 = vmax.f32 %v301, %v140
    %v303 = vmax.f32 %v302, %v141
    %v304 = vmax.f32 %v303, %v142
    %v305 = vmax.f32 %v304, %v143
    %v306 = vmax.f32 %v305, %v144
    %v307 = vmax.f32 %v306, %v145
    %v308 = vmax.f32 %v307, %v146
    %v309 = vmax.f32 %v308, %v147
    %v310 = vmax.f32 %v309, %v148
    %v311 = vmax.f32 %v310, %v149
    %v312 = vmax.f32 %v311, %v150
    %v313 = vmax.f32 %v312, %v151
    %v314 = vmax.f32 %v313, %v152
    %v315 = vrot.slane %v314, 4
    %v316 = vmax.f32 %v314, %v315
    %v317 = vrot.slane %v316, 2
    %v318 = vmax.f32 %v316, %v317
    %v319 = vrot.slane %v318, 1
    %v320 = vmax.f32 %v318, %v319
    %v321 = vmin.f32 %v25, %v26
    %v322 = vmin.f32 %v321, %v27
    %v323 = vmin.f32 %v322, %v28
    %v324 = vmin.f32 %v323, %v29
    %v325 = vmin.f32 %v324, %v30
    %v326 = vmin.f32 %v325, %v31
    %v327 = vmin.f32 %v326, %v32
    %v328 = vmin.f32 %v327, %v33
    %v329 = vmin.f32 %v328, %v34
    %v330 = vmin.f32 %v329, %v35
    %v331 = vmin.f32 %v330, %v36
    %v332 = vmin.f32 %v331, %v37
    %v333 = vmin.f32 %v332, %v38
    %v334 = vmin.f32 %v333, %v39
    %v335 = vmin.f32 %v334, %v40
    %v336 = vrot.slane %v335, 4
    %v337 = vmin.f32 %v335, %v336
    %v338 = vrot.slane %v337, 2
    %v339 = vmin.f32 %v337, %v338
    %v340 = vrot.slane %v339, 1
    %v341 = vmin.f32 %v339, %v340
    %v342 = vmin.f32 %v41, %v42
    %v343 = vmin.f32 %v342, %v43
    %v344 = vmin.f32 %v343, %v44
    %v345 = vmin.f32 %v344, %v45
    %v346 = vmin.f32 %v345, %v46
    %v347 = vmin.f32 %v346, %v47
    %v348 = vmin.f32 %v347, %v48
    %v349 = vmin.f32 %v348, %v49
    %v350 = vmin.f32 %v349, %v50
    %v351 = vmin.f32 %v350, %v51
    %v352 = vmin.f32 %v351, %v52
    %v353 = vmin.f32 %v352, %v53
    %v354 = vmin.f32 %v353, %v54
    %v355 = vmin.f32 %v354, %v55
    %v356 = vmin.f32 %v355, %v56
    %v357 = vrot.slane %v356, 4
    %v358 = vmin.f32 %v356, %v357
    %v359 = vrot.slane %v358, 2
    %v360 = vmin.f32 %v358, %v359
    %v361 = vrot.slane %v360, 1
    %v362 = vmin.f32 %v360, %v361
    %v363 = vmin.f32 %v57, %v58
    %v364 = vmin.f32 %v363, %v59
    %v365 = vmin.f32 %v364, %v60
    %v366 = vmin.f32 %v365, %v61
    %v367 = vmin.f32 %v366, %v62
    %v368 = vmin.f32 %v367, %v63
    %v369 = vmin.f32 %v368, %v64
    %v370 = vmin.f32 %v369, %v65
    %v371 = vmin.f32 %v370, %v66
    %v372 = vmin.f32 %v371, %v67
    %v373 = vmin.f32 %v372, %v68
    %v374 = vmin.f32 %v373, %v69
    %v375 = vmin.f32 %v374, %v70
    %v376 = vmin.f32 %v375, %v71
    %v377 = vmin.f32 %v376, %v72
    %v378 = vrot.slane %v377, 4
    %v379 = vmin.f32 %v377, %v378
    %v380 = vrot.slane %v379, 2
    %v381 = vmin.f32 %v379, %v380
    %v382 = vrot.slane %v381, 1
    %v383 = vmin.f32 %v381, %v382
    %v384 = vmin.f32 %v73, %v74
    %v385 = vmin.f32 %v384, %v75
    %v386 = vmin.f32 %v385, %v76
    %v387 = vmin.f32 %v386, %v77
    %v388 = vmin.f32 %v387, %v78
    %v389 = vmin.f32 %v388, %v79
    %v390 = vmin.f32 %v389, %v80
    %v391 = vmin.f32 %v390, %v81
    %v392 = vmin.f32 %v391, %v82
    %v393 = vmin.f32 %v392, %v83
    %v394 = vmin.f32 %v393, %v84
    %v395 = vmin.f32 %v394, %v85
    %v396 = vmin.f32 %v395, %v86
    %v397 = vmin.f32 %v396, %v87
    %v398 = vmin.f32 %v397, %v88
    %v399 = vrot.slane %v398, 4
    %v400 = vmin.f32 %v398, %v399
    %v401 = vrot.slane %v400, 2
    %v402 = vmin.f32 %v400, %v401
    %v403 = vrot.slane %v402, 1
    %v404 = vmin.f32 %v402, %v403
    %v405 = vmin.f32 %v89, %v90
    %v406 = vmin.f32 %v405, %v91
    %v407 = vmin.f32 %v406, %v92
    %v408 = vmin.f32 %v407, %v93
    %v409 = vmin.f32 %v408, %v94
    %v410 = vmin.f32 %v409, %v95
    %v411 = vmin.f32 %v410, %v96
    %v412 = vmin.f32 %v411, %v97
    %v413 = vmin.f32 %v412, %v98
    %v414 = vmin.f32 %v413, %v99
    %v415 = vmin.f32 %v414, %v100
    %v416 = vmin.f32 %v415, %v101
    %v417 = vmin.f32 %v416, %v102
    %v418 = vmin.f32 %v417, %v103
    %v419 = vmin.f32 %v418, %v104
    %v420 = vrot.slane %v419, 4
    %v421 = vmin.f32 %v419, %v420
    %v422 = vrot.slane %v421, 2
    %v423 = vmin.f32 %v421, %v422
    %v424 = vrot.slane %v423, 1
    %v425 = vmin.f32 %v423, %v424
    %v426 = vmin.f32 %v105, %v106
    %v427 = vmin.f32 %v426, %v107
    %v428 = vmin.f32 %v427, %v108
    %v429 = vmin.f32 %v428, %v109
    %v430 = vmin.f32 %v429, %v110
    %v431 = vmin.f32 %v430, %v111
    %v432 = vmin.f32 %v431, %v112
    %v433 = vmin.f32 %v432, %v113
    %v434 = vmin.f32 %v433, %v114
    %v435 = vmin.f32 %v434, %v115
    %v436 = vmin.f32 %v435, %v116
    %v437 = vmin.f32 %v436, %v117
    %v438 = vmin.f32 %v437, %v118
    %v439 = vmin.f32 %v438, %v119
    %v440 = vmin.f32 %v439, %v120
    %v441 = vrot.slane %v440, 4
    %v442 = vmin.f32 %v440, %v441
    %v443 = vrot.slane %v442, 2
    %v444 = vmin.f32 %v442, %v443
    %v445 = vrot.slane %v444, 1
    %v446 = vmin.f32 %v444, %v445
    %v447 = vmin.f32 %v121, %v122
    %v448 = vmin.f32 %v447, %v123
    %v449 = vmin.f32 %v448, %v124
    %v450 = vmin.f32 %v449, %v125
    %v451 = vmin.f32 %v450, %v126
    %v452 = vmin.f32 %v451, %v127
    %v453 = vmin.f32 %v452, %v128
    %v454 = vmin.f32 %v453, %v129
    %v455 = vmin.f32 %v454, %v130
    %v456 = vmin.f32 %v455, %v131
    %v457 = vmin.f32 %v456, %v132
    %v458 = vmin.f32 %v457, %v133
    %v459 = vmin.f32 %v458, %v134
    %v460 = vmin.f32 %v459, %v135
    %v461 = vmin.f32 %v460, %v136
    %v462 = vrot.slane %v461, 4
    %v463 = vmin.f32 %v461, %v462
    %v464 = vrot.slane %v463, 2
    %v465 = vmin.f32 %v463, %v464
    %v466 = vrot.slane %v465, 1
    %v467 = vmin.f32 %v465, %v466
    %v468 = vmin.f32 %v137, %v138
    %v469 = vmin.f32 %v468, %v139
    %v470 = vmin.f32 %v469, %v140
    %v471 = vmin.f32 %v470, %v141
    %v472 = vmin.f32 %v471, %v142
    %v473 = vmin.f32 %v472, %v143
    %v474 = vmin.f32 %v473, %v144
    %v475 = vmin.f32 %v474, %v145
    %v476 = vmin.f32 %v475, %v146
    %v477 = vmin.f32 %v476, %v147
    %v478 = vmin.f32 %v477, %v148
    %v479 = vmin.f32 %v478, %v149
    %v480 = vmin.f32 %v479, %v150
    %v481 = vmin.f32 %v480, %v151
    %v482 = vmin.f32 %v481, %v152
    %v483 = vrot.slane %v482, 4
    %v484 = vmin.f32 %v482, %v483
    %v485 = vrot.slane %v484, 2
    %v486 = vmin.f32 %v484, %v485
    %v487 = vrot.slane %v486, 1
    %v488 = vmin.f32 %v486, %v487
    %v489 = vsub.f32 %v173, %v341
    %v490 = vsub.f32 %v194, %v362
    %v491 = vsub.f32 %v215, %v383
    %v492 = vsub.f32 %v236, %v404
    %v493 = vsub.f32 %v257, %v425
    %v494 = vsub.f32 %v278, %v446
    %v495 = vsub.f32 %v299, %v467
    %v496 = vsub.f32 %v320, %v488
    %v497 = vmax.f32 %v489, 1e-08
    %v498 = vmax.f32 %v490, 1e-08
    %v499 = vmax.f32 %v491, 1e-08
    %v500 = vmax.f32 %v492, 1e-08
    %v501 = vmax.f32 %v493, 1e-08
    %v502 = vmax.f32 %v494, 1e-08
    %v503 = vmax.f32 %v495, 1e-08
    %v504 = vmax.f32 %v496, 1e-08
    %v505 = vrcp.pop 255.0
    %v506 = vmul.f32 255.0, %v505
    %v507 = vsub.f32 1.0, %v506
    %v508 = vmul.f32 %v505, %v507
    %v509 = vadd.f32 %v505, %v508
    %vm510 = vweird.f32 %v505
    %v511 = vsel %vm510, %v505, %v509
    %v512 = vmul.f32 %v497, %v511
    %v513 = vmul.f32 %v498, %v511
    %v514 = vmul.f32 %v499, %v511
    %v515 = vmul.f32 %v500, %v511
    %v516 = vmul.f32 %v501, %v511
    %v517 = vmul.f32 %v502, %v511
    %v518 = vmul.f32 %v503, %v511
    %v519 = vmul.f32 %v504, %v511
    %v520 = vrcp.pop %v512
    %v521 = vmul.f32 %v512, %v520
    %v522 = vsub.f32 1.0, %v521
    %v523 = vmul.f32 %v520, %v522
    %v524 = vadd.f32 %v520, %v523
    %vm525 = vweird.f32 %v512
    %vm526 = vweird.f32 %v520
    %vm527 = vmor %vm525, %vm526
    %v528 = vsel %vm527, %v520, %v524
    %v529 = vand.u32 2147483647, %v512
    %vm530 = vcmp.eq.f32.partialorder %v529, 8.507059e+37
    %v531 = vand.u32 %v512, 2147483648
    %v532 = vor.u32 1.1754944e-38, %v531
    %v533 = vsel %vm530, %v532, %v528
    %v534 = vmul.f32 1.0, %v533
    %v535 = vrcp.pop %v513
    %v536 = vmul.f32 %v513, %v535
    %v537 = vsub.f32 1.0, %v536
    %v538 = vmul.f32 %v535, %v537
    %v539 = vadd.f32 %v535, %v538
    %vm540 = vweird.f32 %v513
    %vm541 = vweird.f32 %v535
    %vm542 = vmor %vm540, %vm541
    %v543 = vsel %vm542, %v535, %v539
    %v544 = vand.u32 2147483647, %v513
    %vm545 = vcmp.eq.f32.partialorder %v544, 8.507059e+37
    %v546 = vand.u32 %v513, 2147483648
    %v547 = vor.u32 1.1754944e-38, %v546
    %v548 = vsel %vm545, %v547, %v543
    %v549 = vmul.f32 1.0, %v548
    %v550 = vrcp.pop %v514
    %v551 = vmul.f32 %v514, %v550
    %v552 = vsub.f32 1.0, %v551
    %v553 = vmul.f32 %v550, %v552
    %v554 = vadd.f32 %v550, %v553
    %vm555 = vweird.f32 %v514
    %vm556 = vweird.f32 %v550
    %vm557 = vmor %vm555, %vm556
    %v558 = vsel %vm557, %v550, %v554
    %v559 = vand.u32 2147483647, %v514
    %vm560 = vcmp.eq.f32.partialorder %v559, 8.507059e+37
    %v561 = vand.u32 %v514, 2147483648
    %v562 = vor.u32 1.1754944e-38, %v561
    %v563 = vsel %vm560, %v562, %v558
    %v564 = vmul.f32 1.0, %v563
    %v565 = vrcp.pop %v515
    %v566 = vmul.f32 %v515, %v565
    %v567 = vsub.f32 1.0, %v566
    %v568 = vmul.f32 %v565, %v567
    %v569 = vadd.f32 %v565, %v568
    %vm570 = vweird.f32 %v515
    %vm571 = vweird.f32 %v565
    %vm572 = vmor %vm570, %vm571
    %v573 = vsel %vm572, %v565, %v569
    %v574 = vand.u32 2147483647, %v515
    %vm575 = vcmp.eq.f32.partialorder %v574, 8.507059e+37
    %v576 = vand.u32 %v515, 2147483648
    %v577 = vor.u32 1.1754944e-38, %v576
    %v578 = vsel %vm575, %v577, %v573
    %v579 = vmul.f32 1.0, %v578
    %v580 = vrcp.pop %v516
    %v581 = vmul.f32 %v516, %v580
    %v582 = vsub.f32 1.0, %v581
    %v583 = vmul.f32 %v580, %v582
    %v584 = vadd.f32 %v580, %v583
    %vm585 = vweird.f32 %v516
    %vm586 = vweird.f32 %v580
    %vm587 = vmor %vm585, %vm586
    %v588 = vsel %vm587, %v580, %v584
    %v589 = vand.u32 2147483647, %v516
    %vm590 = vcmp.eq.f32.partialorder %v589, 8.507059e+37
    %v591 = vand.u32 %v516, 2147483648
    %v592 = vor.u32 1.1754944e-38, %v591
    %v593 = vsel %vm590, %v592, %v588
    %v594 = vmul.f32 1.0, %v593
    %v595 = vrcp.pop %v517
    %v596 = vmul.f32 %v517, %v595
    %v597 = vsub.f32 1.0, %v596
    %v598 = vmul.f32 %v595, %v597
    %v599 = vadd.f32 %v595, %v598
    %vm600 = vweird.f32 %v517
    %vm601 = vweird.f32 %v595
    %vm602 = vmor %vm600, %vm601
    %v603 = vsel %vm602, %v595, %v599
    %v604 = vand.u32 2147483647, %v517
    %vm605 = vcmp.eq.f32.partialorder %v604, 8.507059e+37
    %v606 = vand.u32 %v517, 2147483648
    %v607 = vor.u32 1.1754944e-38, %v606
    %v608 = vsel %vm605, %v607, %v603
    %v609 = vmul.f32 1.0, %v608
    %v610 = vrcp.pop %v518
    %v611 = vmul.f32 %v518, %v610
    %v612 = vsub.f32 1.0, %v611
    %v613 = vmul.f32 %v610, %v612
    %v614 = vadd.f32 %v610, %v613
    %vm615 = vweird.f32 %v518
    %vm616 = vweird.f32 %v610
    %vm617 = vmor %vm615, %vm616
    %v618 = vsel %vm617, %v610, %v614
    %v619 = vand.u32 2147483647, %v518
    %vm620 = vcmp.eq.f32.partialorder %v619, 8.507059e+37
    %v621 = vand.u32 %v518, 2147483648
    %v622 = vor.u32 1.1754944e-38, %v621
    %v623 = vsel %vm620, %v622, %v618
    %v624 = vmul.f32 1.0, %v623
    %v625 = vrcp.pop %v519
    %v626 = vmul.f32 %v519, %v625
    %v627 = vsub.f32 1.0, %v626
    %v628 = vmul.f32 %v625, %v627
    %v629 = vadd.f32 %v625, %v628
    %vm630 = vweird.f32 %v519
    %vm631 = vweird.f32 %v625
    %vm632 = vmor %vm630, %vm631
    %v633 = vsel %vm632, %v625, %v629
    %v634 = vand.u32 2147483647, %v519
    %vm635 = vcmp.eq.f32.partialorder %v634, 8.507059e+37
    %v636 = vand.u32 %v519, 2147483648
    %v637 = vor.u32 1.1754944e-38, %v636
    %v638 = vsel %vm635, %v637, %v633
    %v639 = vmul.f32 1.0, %v638
    %v640 = vsub.f32 0.0, %v341
    %v641 = vsub.f32 0.0, %v362
    %v642 = vsub.f32 0.0, %v383
    %v643 = vsub.f32 0.0, %v404
    %v644 = vsub.f32 0.0, %v425
    %v645 = vsub.f32 0.0, %v446
    %v646 = vsub.f32 0.0, %v467
    %v647 = vsub.f32 0.0, %v488
    %v648 = vmul.f32 %v640, %v534
    %v649 = vmul.f32 %v641, %v549
    %v650 = vmul.f32 %v642, %v564
    %v651 = vmul.f32 %v643, %v579
    %v652 = vmul.f32 %v644, %v594
    %v653 = vmul.f32 %v645, %v609
    %v654 = vmul.f32 %v646, %v624
    %v655 = vmul.f32 %v647, %v639
    %v656 = vround.ne.pseudo %v648
    %v657 = vround.ne.pseudo %v649
    %v658 = vround.ne.pseudo %v650
    %v659 = vround.ne.pseudo %v651
    %v660 = vround.ne.pseudo %v652
    %v661 = vround.ne.pseudo %v653
    %v662 = vround.ne.pseudo %v654
    %v663 = vround.ne.pseudo %v655
    %v664 = vmul.f32 %v25, %v534
    %v665 = vmul.f32 %v26, %v534
    %v666 = vmul.f32 %v27, %v534
    %v667 = vmul.f32 %v28, %v534
    %v668 = vmul.f32 %v29, %v534
    %v669 = vmul.f32 %v30, %v534
    %v670 = vmul.f32 %v31, %v534
    %v671 = vmul.f32 %v32, %v534
    %v672 = vmul.f32 %v33, %v534
    %v673 = vmul.f32 %v34, %v534
    %v674 = vmul.f32 %v35, %v534
    %v675 = vmul.f32 %v36, %v534
    %v676 = vmul.f32 %v37, %v534
    %v677 = vmul.f32 %v38, %v534
    %v678 = vmul.f32 %v39, %v534
    %v679 = vmul.f32 %v40, %v534
    %v680 = vmul.f32 %v41, %v549
    %v681 = vmul.f32 %v42, %v549
    %v682 = vmul.f32 %v43, %v549
    %v683 = vmul.f32 %v44, %v549
    %v684 = vmul.f32 %v45, %v549
    %v685 = vmul.f32 %v46, %v549
    %v686 = vmul.f32 %v47, %v549
    %v687 = vmul.f32 %v48, %v549
    %v688 = vmul.f32 %v49, %v549
    %v689 = vmul.f32 %v50, %v549
    %v690 = vmul.f32 %v51, %v549
    %v691 = vmul.f32 %v52, %v549
    %v692 = vmul.f32 %v53, %v549
    %v693 = vmul.f32 %v54, %v549
    %v694 = vmul.f32 %v55, %v549
    %v695 = vmul.f32 %v56, %v549
    %v696 = vmul.f32 %v57, %v564
    %v697 = vmul.f32 %v58, %v564
    %v698 = vmul.f32 %v59, %v564
    %v699 = vmul.f32 %v60, %v564
    %v700 = vmul.f32 %v61, %v564
    %v701 = vmul.f32 %v62, %v564
    %v702 = vmul.f32 %v63, %v564
    %v703 = vmul.f32 %v64, %v564
    %v704 = vmul.f32 %v65, %v564
    %v705 = vmul.f32 %v66, %v564
    %v706 = vmul.f32 %v67, %v564
    %v707 = vmul.f32 %v68, %v564
    %v708 = vmul.f32 %v69, %v564
    %v709 = vmul.f32 %v70, %v564
    %v710 = vmul.f32 %v71, %v564
    %v711 = vmul.f32 %v72, %v564
    %v712 = vmul.f32 %v73, %v579
    %v713 = vmul.f32 %v74, %v579
    %v714 = vmul.f32 %v75, %v579
    %v715 = vmul.f32 %v76, %v579
    %v716 = vmul.f32 %v77, %v579
    %v717 = vmul.f32 %v78, %v579
    %v718 = vmul.f32 %v79, %v579
    %v719 = vmul.f32 %v80, %v579
    %v720 = vmul.f32 %v81, %v579
    %v721 = vmul.f32 %v82, %v579
    %v722 = vmul.f32 %v83, %v579
    %v723 = vmul.f32 %v84, %v579
    %v724 = vmul.f32 %v85, %v579
    %v725 = vmul.f32 %v86, %v579
    %v726 = vmul.f32 %v87, %v579
    %v727 = vmul.f32 %v88, %v579
    %v728 = vmul.f32 %v89, %v594
    %v729 = vmul.f32 %v90, %v594
    %v730 = vmul.f32 %v91, %v594
    %v731 = vmul.f32 %v92, %v594
    %v732 = vmul.f32 %v93, %v594
    %v733 = vmul.f32 %v94, %v594
    %v734 = vmul.f32 %v95, %v594
    %v735 = vmul.f32 %v96, %v594
    %v736 = vmul.f32 %v97, %v594
    %v737 = vmul.f32 %v98, %v594
    %v738 = vmul.f32 %v99, %v594
    %v739 = vmul.f32 %v100, %v594
    %v740 = vmul.f32 %v101, %v594
    %v741 = vmul.f32 %v102, %v594
    %v742 = vmul.f32 %v103, %v594
    %v743 = vmul.f32 %v104, %v594
    %v744 = vmul.f32 %v105, %v609
    %v745 = vmul.f32 %v106, %v609
    %v746 = vmul.f32 %v107, %v609
    %v747 = vmul.f32 %v108, %v609
    %v748 = vmul.f32 %v109, %v609
    %v749 = vmul.f32 %v110, %v609
    %v750 = vmul.f32 %v111, %v609
    %v751 = vmul.f32 %v112, %v609
    %v752 = vmul.f32 %v113, %v609
    %v753 = vmul.f32 %v114, %v609
    %v754 = vmul.f32 %v115, %v609
    %v755 = vmul.f32 %v116, %v609
    %v756 = vmul.f32 %v117, %v609
    %v757 = vmul.f32 %v118, %v609
    %v758 = vmul.f32 %v119, %v609
    %v759 = vmul.f32 %v120, %v609
    %v760 = vmul.f32 %v121, %v624
    %v761 = vmul.f32 %v122, %v624
    %v762 = vmul.f32 %v123, %v624
    %v763 = vmul.f32 %v124, %v624
    %v764 = vmul.f32 %v125, %v624
    %v765 = vmul.f32 %v126, %v624
    %v766 = vmul.f32 %v127, %v624
    %v767 = vmul.f32 %v128, %v624
    %v768 = vmul.f32 %v129, %v624
    %v769 = vmul.f32 %v130, %v624
    %v770 = vmul.f32 %v131, %v624
    %v771 = vmul.f32 %v132, %v624
    %v772 = vmul.f32 %v133, %v624
    %v773 = vmul.f32 %v134, %v624
    %v774 = vmul.f32 %v135, %v624
    %v775 = vmul.f32 %v136, %v624
    %v776 = vmul.f32 %v137, %v639
    %v777 = vmul.f32 %v138, %v639
    %v778 = vmul.f32 %v139, %v639
    %v779 = vmul.f32 %v140, %v639
    %v780 = vmul.f32 %v141, %v639
    %v781 = vmul.f32 %v142, %v639
    %v782 = vmul.f32 %v143, %v639
    %v783 = vmul.f32 %v144, %v639
    %v784 = vmul.f32 %v145, %v639
    %v785 = vmul.f32 %v146, %v639
    %v786 = vmul.f32 %v147, %v639
    %v787 = vmul.f32 %v148, %v639
    %v788 = vmul.f32 %v149, %v639
    %v789 = vmul.f32 %v150, %v639
    %v790 = vmul.f32 %v151, %v639
    %v791 = vmul.f32 %v152, %v639
    %v792 = vround.ne.pseudo %v664
    %v793 = vround.ne.pseudo %v665
    %v794 = vround.ne.pseudo %v666
    %v795 = vround.ne.pseudo %v667
    %v796 = vround.ne.pseudo %v668
    %v797 = vround.ne.pseudo %v669
    %v798 = vround.ne.pseudo %v670
    %v799 = vround.ne.pseudo %v671
    %v800 = vround.ne.pseudo %v672
    %v801 = vround.ne.pseudo %v673
    %v802 = vround.ne.pseudo %v674
    %v803 = vround.ne.pseudo %v675
    %v804 = vround.ne.pseudo %v676
    %v805 = vround.ne.pseudo %v677
    %v806 = vround.ne.pseudo %v678
    %v807 = vround.ne.pseudo %v679
    %v808 = vround.ne.pseudo %v680
    %v809 = vround.ne.pseudo %v681
    %v810 = vround.ne.pseudo %v682
    %v811 = vround.ne.pseudo %v683
    %v812 = vround.ne.pseudo %v684
    %v813 = vround.ne.pseudo %v685
    %v814 = vround.ne.pseudo %v686
    %v815 = vround.ne.pseudo %v687
    %v816 = vround.ne.pseudo %v688
    %v817 = vround.ne.pseudo %v689
    %v818 = vround.ne.pseudo %v690
    %v819 = vround.ne.pseudo %v691
    %v820 = vround.ne.pseudo %v692
    %v821 = vround.ne.pseudo %v693
    %v822 = vround.ne.pseudo %v694
    %v823 = vround.ne.pseudo %v695
    %v824 = vround.ne.pseudo %v696
    %v825 = vround.ne.pseudo %v697
    %v826 = vround.ne.pseudo %v698
    %v827 = vround.ne.pseudo %v699
    %v828 = vround.ne.pseudo %v700
    %v829 = vround.ne.pseudo %v701
    %v830 = vround.ne.pseudo %v702
    %v831 = vround.ne.pseudo %v703
    %v832 = vround.ne.pseudo %v704
    %v833 = vround.ne.pseudo %v705
    %v834 = vround.ne.pseudo %v706
    %v835 = vround.ne.pseudo %v707
    %v836 = vround.ne.pseudo %v708
    %v837 = vround.ne.pseudo %v709
    %v838 = vround.ne.pseudo %v710
    %v839 = vround.ne.pseudo %v711
    %v840 = vround.ne.pseudo %v712
    %v841 = vround.ne.pseudo %v713
    %v842 = vround.ne.pseudo %v714
    %v843 = vround.ne.pseudo %v715
    %v844 = vround.ne.pseudo %v716
    %v845 = vround.ne.pseudo %v717
    %v846 = vround.ne.pseudo %v718
    %v847 = vround.ne.pseudo %v719
    %v848 = vround.ne.pseudo %v720
    %v849 = vround.ne.pseudo %v721
    %v850 = vround.ne.pseudo %v722
    %v851 = vround.ne.pseudo %v723
    %v852 = vround.ne.pseudo %v724
    %v853 = vround.ne.pseudo %v725
    %v854 = vround.ne.pseudo %v726
    %v855 = vround.ne.pseudo %v727
    %v856 = vround.ne.pseudo %v728
    %v857 = vround.ne.pseudo %v729
    %v858 = vround.ne.pseudo %v730
    %v859 = vround.ne.pseudo %v731
    %v860 = vround.ne.pseudo %v732
    %v861 = vround.ne.pseudo %v733
    %v862 = vround.ne.pseudo %v734
    %v863 = vround.ne.pseudo %v735
    %v864 = vround.ne.pseudo %v736
    %v865 = vround.ne.pseudo %v737
    %v866 = vround.ne.pseudo %v738
    %v867 = vround.ne.pseudo %v739
    %v868 = vround.ne.pseudo %v740
    %v869 = vround.ne.pseudo %v741
    %v870 = vround.ne.pseudo %v742
    %v871 = vround.ne.pseudo %v743
    %v872 = vround.ne.pseudo %v744
    %v873 = vround.ne.pseudo %v745
    %v874 = vround.ne.pseudo %v746
    %v875 = vround.ne.pseudo %v747
    %v876 = vround.ne.pseudo %v748
    %v877 = vround.ne.pseudo %v749
    %v878 = vround.ne.pseudo %v750
    %v879 = vround.ne.pseudo %v751
    %v880 = vround.ne.pseudo %v752
    %v881 = vround.ne.pseudo %v753
    %v882 = vround.ne.pseudo %v754
    %v883 = vround.ne.pseudo %v755
    %v884 = vround.ne.pseudo %v756
    %v885 = vround.ne.pseudo %v757
    %v886 = vround.ne.pseudo %v758
    %v887 = vround.ne.pseudo %v759
    %v888 = vround.ne.pseudo %v760
    %v889 = vround.ne.pseudo %v761
    %v890 = vround.ne.pseudo %v762
    %v891 = vround.ne.pseudo %v763
    %v892 = vround.ne.pseudo %v764
    %v893 = vround.ne.pseudo %v765
    %v894 = vround.ne.pseudo %v766
    %v895 = vround.ne.pseudo %v767
    %v896 = vround.ne.pseudo %v768
    %v897 = vround.ne.pseudo %v769
    %v898 = vround.ne.pseudo %v770
    %v899 = vround.ne.pseudo %v771
    %v900 = vround.ne.pseudo %v772
    %v901 = vround.ne.pseudo %v773
    %v902 = vround.ne.pseudo %v774
    %v903 = vround.ne.pseudo %v775
    %v904 = vround.ne.pseudo %v776
    %v905 = vround.ne.pseudo %v777
    %v906 = vround.ne.pseudo %v778
    %v907 = vround.ne.pseudo %v779
    %v908 = vround.ne.pseudo %v780
    %v909 = vround.ne.pseudo %v781
    %v910 = vround.ne.pseudo %v782
    %v911 = vround.ne.pseudo %v783
    %v912 = vround.ne.pseudo %v784
    %v913 = vround.ne.pseudo %v785
    %v914 = vround.ne.pseudo %v786
    %v915 = vround.ne.pseudo %v787
    %v916 = vround.ne.pseudo %v788
    %v917 = vround.ne.pseudo %v789
    %v918 = vround.ne.pseudo %v790
    %v919 = vround.ne.pseudo %v791
    %v920 = vsub.f32 255.0, %v656
    %v921 = vsub.f32 255.0, %v657
    %v922 = vsub.f32 255.0, %v658
    %v923 = vsub.f32 255.0, %v659
    %v924 = vsub.f32 255.0, %v660
    %v925 = vsub.f32 255.0, %v661
    %v926 = vsub.f32 255.0, %v662
    %v927 = vsub.f32 255.0, %v663
    %v928 = vmin.f32 %v792, %v920
    %v929 = vmin.f32 %v793, %v920
    %v930 = vmin.f32 %v794, %v920
    %v931 = vmin.f32 %v795, %v920
    %v932 = vmin.f32 %v796, %v920
    %v933 = vmin.f32 %v797, %v920
    %v934 = vmin.f32 %v798, %v920
    %v935 = vmin.f32 %v799, %v920
    %v936 = vmin.f32 %v800, %v920
    %v937 = vmin.f32 %v801, %v920
    %v938 = vmin.f32 %v802, %v920
    %v939 = vmin.f32 %v803, %v920
    %v940 = vmin.f32 %v804, %v920
    %v941 = vmin.f32 %v805, %v920
    %v942 = vmin.f32 %v806, %v920
    %v943 = vmin.f32 %v807, %v920
    %v944 = vmin.f32 %v808, %v921
    %v945 = vmin.f32 %v809, %v921
    %v946 = vmin.f32 %v810, %v921
    %v947 = vmin.f32 %v811, %v921
    %v948 = vmin.f32 %v812, %v921
    %v949 = vmin.f32 %v813, %v921
    %v950 = vmin.f32 %v814, %v921
    %v951 = vmin.f32 %v815, %v921
    %v952 = vmin.f32 %v816, %v921
    %v953 = vmin.f32 %v817, %v921
    %v954 = vmin.f32 %v818, %v921
    %v955 = vmin.f32 %v819, %v921
    %v956 = vmin.f32 %v820, %v921
    %v957 = vmin.f32 %v821, %v921
    %v958 = vmin.f32 %v822, %v921
    %v959 = vmin.f32 %v823, %v921
    %v960 = vmin.f32 %v824, %v922
    %v961 = vmin.f32 %v825, %v922
    %v962 = vmin.f32 %v826, %v922
    %v963 = vmin.f32 %v827, %v922
    %v964 = vmin.f32 %v828, %v922
    %v965 = vmin.f32 %v829, %v922
    %v966 = vmin.f32 %v830, %v922
    %v967 = vmin.f32 %v831, %v922
    %v968 = vmin.f32 %v832, %v922
    %v969 = vmin.f32 %v833, %v922
    %v970 = vmin.f32 %v834, %v922
    %v971 = vmin.f32 %v835, %v922
    %v972 = vmin.f32 %v836, %v922
    %v973 = vmin.f32 %v837, %v922
    %v974 = vmin.f32 %v838, %v922
    %v975 = vmin.f32 %v839, %v922
    %v976 = vmin.f32 %v840, %v923
    %v977 = vmin.f32 %v841, %v923
    %v978 = vmin.f32 %v842, %v923
    %v979 = vmin.f32 %v843, %v923
    %v980 = vmin.f32 %v844, %v923
    %v981 = vmin.f32 %v845, %v923
    %v982 = vmin.f32 %v846, %v923
    %v983 = vmin.f32 %v847, %v923
    %v984 = vmin.f32 %v848, %v923
    %v985 = vmin.f32 %v849, %v923
    %v986 = vmin.f32 %v850, %v923
    %v987 = vmin.f32 %v851, %v923
    %v988 = vmin.f32 %v852, %v923
    %v989 = vmin.f32 %v853, %v923
    %v990 = vmin.f32 %v854, %v923
    %v991 = vmin.f32 %v855, %v923
    %v992 = vmin.f32 %v856, %v924
    %v993 = vmin.f32 %v857, %v924
    %v994 = vmin.f32 %v858, %v924
    %v995 = vmin.f32 %v859, %v924
    %v996 = vmin.f32 %v860, %v924
    %v997 = vmin.f32 %v861, %v924
    %v998 = vmin.f32 %v862, %v924
    %v999 = vmin.f32 %v863, %v924
    %v1000 = vmin.f32 %v864, %v924
    %v1001 = vmin.f32 %v865, %v924
    %v1002 = vmin.f32 %v866, %v924
    %v1003 = vmin.f32 %v867, %v924
    %v1004 = vmin.f32 %v868, %v924
    %v1005 = vmin.f32 %v869, %v924
    %v1006 = vmin.f32 %v870, %v924
    %v1007 = vmin.f32 %v871, %v924
    %v1008 = vmin.f32 %v872, %v925
    %v1009 = vmin.f32 %v873, %v925
    %v1010 = vmin.f32 %v874, %v925
    %v1011 = vmin.f32 %v875, %v925
    %v1012 = vmin.f32 %v876, %v925
    %v1013 = vmin.f32 %v877, %v925
    %v1014 = vmin.f32 %v878, %v925
    %v1015 = vmin.f32 %v879, %v925
    %v1016 = vmin.f32 %v880, %v925
    %v1017 = vmin.f32 %v881, %v925
    %v1018 = vmin.f32 %v882, %v925
    %v1019 = vmin.f32 %v883, %v925
    %v1020 = vmin.f32 %v884, %v925
    %v1021 = vmin.f32 %v885, %v925
    %v1022 = vmin.f32 %v886, %v925
    %v1023 = vmin.f32 %v887, %v925
    %v1024 = vmin.f32 %v888, %v926
    %v1025 = vmin.f32 %v889, %v926
    %v1026 = vmin.f32 %v890, %v926
    %v1027 = vmin.f32 %v891, %v926
    %v1028 = vmin.f32 %v892, %v926
    %v1029 = vmin.f32 %v893, %v926
    %v1030 = vmin.f32 %v894, %v926
    %v1031 = vmin.f32 %v895, %v926
    %v1032 = vmin.f32 %v896, %v926
    %v1033 = vmin.f32 %v897, %v926
    %v1034 = vmin.f32 %v898, %v926
    %v1035 = vmin.f32 %v899, %v926
    %v1036 = vmin.f32 %v900, %v926
    %v1037 = vmin.f32 %v901, %v926
    %v1038 = vmin.f32 %v902, %v926
    %v1039 = vmin.f32 %v903, %v926
    %v1040 = vmin.f32 %v904, %v927
    %v1041 = vmin.f32 %v905, %v927
    %v1042 = vmin.f32 %v906, %v927
    %v1043 = vmin.f32 %v907, %v927
    %v1044 = vmin.f32 %v908, %v927
    %v1045 = vmin.f32 %v909, %v927
    %v1046 = vmin.f32 %v910, %v927
    %v1047 = vmin.f32 %v911, %v927
    %v1048 = vmin.f32 %v912, %v927
    %v1049 = vmin.f32 %v913, %v927
    %v1050 = vmin.f32 %v914, %v927
    %v1051 = vmin.f32 %v915, %v927
    %v1052 = vmin.f32 %v916, %v927
    %v1053 = vmin.f32 %v917, %v927
    %v1054 = vmin.f32 %v918, %v927
    %v1055 = vmin.f32 %v919, %v927
    %v1056 = vmul.f32 %v928, %v512
    %v1057 = vmul.f32 %v929, %v512
    %v1058 = vmul.f32 %v930, %v512
    %v1059 = vmul.f32 %v931, %v512
    %v1060 = vmul.f32 %v932, %v512
    %v1061 = vmul.f32 %v933, %v512
    %v1062 = vmul.f32 %v934, %v512
    %v1063 = vmul.f32 %v935, %v512
    %v1064 = vmul.f32 %v936, %v512
    %v1065 = vmul.f32 %v937, %v512
    %v1066 = vmul.f32 %v938, %v512
    %v1067 = vmul.f32 %v939, %v512
    %v1068 = vmul.f32 %v940, %v512
    %v1069 = vmul.f32 %v941, %v512
    %v1070 = vmul.f32 %v942, %v512
    %v1071 = vmul.f32 %v943, %v512
    %v1072 = vmul.f32 %v944, %v513
    %v1073 = vmul.f32 %v945, %v513
    %v1074 = vmul.f32 %v946, %v513
    %v1075 = vmul.f32 %v947, %v513
    %v1076 = vmul.f32 %v948, %v513
    %v1077 = vmul.f32 %v949, %v513
    %v1078 = vmul.f32 %v950, %v513
    %v1079 = vmul.f32 %v951, %v513
    %v1080 = vmul.f32 %v952, %v513
    %v1081 = vmul.f32 %v953, %v513
    %v1082 = vmul.f32 %v954, %v513
    %v1083 = vmul.f32 %v955, %v513
    %v1084 = vmul.f32 %v956, %v513
    %v1085 = vmul.f32 %v957, %v513
    %v1086 = vmul.f32 %v958, %v513
    %v1087 = vmul.f32 %v959, %v513
    %v1088 = vmul.f32 %v960, %v514
    %v1089 = vmul.f32 %v961, %v514
    %v1090 = vmul.f32 %v962, %v514
    %v1091 = vmul.f32 %v963, %v514
    %v1092 = vmul.f32 %v964, %v514
    %v1093 = vmul.f32 %v965, %v514
    %v1094 = vmul.f32 %v966, %v514
    %v1095 = vmul.f32 %v967, %v514
    %v1096 = vmul.f32 %v968, %v514
    %v1097 = vmul.f32 %v969, %v514
    %v1098 = vmul.f32 %v970, %v514
    %v1099 = vmul.f32 %v971, %v514
    %v1100 = vmul.f32 %v972, %v514
    %v1101 = vmul.f32 %v973, %v514
    %v1102 = vmul.f32 %v974, %v514
    %v1103 = vmul.f32 %v975, %v514
    %v1104 = vmul.f32 %v976, %v515
    %v1105 = vmul.f32 %v977, %v515
    %v1106 = vmul.f32 %v978, %v515
    %v1107 = vmul.f32 %v979, %v515
    %v1108 = vmul.f32 %v980, %v515
    %v1109 = vmul.f32 %v981, %v515
    %v1110 = vmul.f32 %v982, %v515
    %v1111 = vmul.f32 %v983, %v515
    %v1112 = vmul.f32 %v984, %v515
    %v1113 = vmul.f32 %v985, %v515
    %v1114 = vmul.f32 %v986, %v515
    %v1115 = vmul.f32 %v987, %v515
    %v1116 = vmul.f32 %v988, %v515
    %v1117 = vmul.f32 %v989, %v515
    %v1118 = vmul.f32 %v990, %v515
    %v1119 = vmul.f32 %v991, %v515
    %v1120 = vmul.f32 %v992, %v516
    %v1121 = vmul.f32 %v993, %v516
    %v1122 = vmul.f32 %v994, %v516
    %v1123 = vmul.f32 %v995, %v516
    %v1124 = vmul.f32 %v996, %v516
    %v1125 = vmul.f32 %v997, %v516
    %v1126 = vmul.f32 %v998, %v516
    %v1127 = vmul.f32 %v999, %v516
    %v1128 = vmul.f32 %v1000, %v516
    %v1129 = vmul.f32 %v1001, %v516
    %v1130 = vmul.f32 %v1002, %v516
    %v1131 = vmul.f32 %v1003, %v516
    %v1132 = vmul.f32 %v1004, %v516
    %v1133 = vmul.f32 %v1005, %v516
    %v1134 = vmul.f32 %v1006, %v516
    %v1135 = vmul.f32 %v1007, %v516
    %v1136 = vmul.f32 %v1008, %v517
    %v1137 = vmul.f32 %v1009, %v517
    %v1138 = vmul.f32 %v1010, %v517
    %v1139 = vmul.f32 %v1011, %v517
    %v1140 = vmul.f32 %v1012, %v517
    %v1141 = vmul.f32 %v1013, %v517
    %v1142 = vmul.f32 %v1014, %v517
    %v1143 = vmul.f32 %v1015, %v517
    %v1144 = vmul.f32 %v1016, %v517
    %v1145 = vmul.f32 %v1017, %v517
    %v1146 = vmul.f32 %v1018, %v517
    %v1147 = vmul.f32 %v1019, %v517
    %v1148 = vmul.f32 %v1020, %v517
    %v1149 = vmul.f32 %v1021, %v517
    %v1150 = vmul.f32 %v1022, %v517
    %v1151 = vmul.f32 %v1023, %v517
    %v1152 = vmul.f32 %v1024, %v518
    %v1153 = vmul.f32 %v1025, %v518
    %v1154 = vmul.f32 %v1026, %v518
    %v1155 = vmul.f32 %v1027, %v518
    %v1156 = vmul.f32 %v1028, %v518
    %v1157 = vmul.f32 %v1029, %v518
    %v1158 = vmul.f32 %v1030, %v518
    %v1159 = vmul.f32 %v1031, %v518
    %v1160 = vmul.f32 %v1032, %v518
    %v1161 = vmul.f32 %v1033, %v518
    %v1162 = vmul.f32 %v1034, %v518
    %v1163 = vmul.f32 %v1035, %v518
    %v1164 = vmul.f32 %v1036, %v518
    %v1165 = vmul.f32 %v1037, %v518
    %v1166 = vmul.f32 %v1038, %v518
    %v1167 = vmul.f32 %v1039, %v518
    %v1168 = vmul.f32 %v1040, %v519
    %v1169 = vmul.f32 %v1041, %v519
    %v1170 = vmul.f32 %v1042, %v519
    %v1171 = vmul.f32 %v1043, %v519
    %v1172 = vmul.f32 %v1044, %v519
    %v1173 = vmul.f32 %v1045, %v519
    %v1174 = vmul.f32 %v1046, %v519
    %v1175 = vmul.f32 %v1047, %v519
    %v1176 = vmul.f32 %v1048, %v519
    %v1177 = vmul.f32 %v1049, %v519
    %v1178 = vmul.f32 %v1050, %v519
    %v1179 = vmul.f32 %v1051, %v519
    %v1180 = vmul.f32 %v1052, %v519
    %v1181 = vmul.f32 %v1053, %v519
    %v1182 = vmul.f32 %v1054, %v519
    %v1183 = vmul.f32 %v1055, %v519
    %1184 = vst [vmem:[#allocation5] sm:$0xff] %v1056
    %1185 = vst [vmem:[#allocation5 + $0x8] sm:$0xff] %v1057
    %1186 = vst [vmem:[#allocation5 + $0x10] sm:$0xff] %v1058
    %1187 = vst [vmem:[#allocation5 + $0x18] sm:$0xff] %v1059
    %1188 = vst [vmem:[#allocation5 + $0x20] sm:$0xff] %v1060
    %1189 = vst [vmem:[#allocation5 + $0x28] sm:$0xff] %v1061
    %1190 = vst [vmem:[#allocation5 + $0x30] sm:$0xff] %v1062
    %1191 = vst [vmem:[#allocation5 + $0x38] sm:$0xff] %v1063
    %1192 = vst [vmem:[#allocation5 + $0x40] sm:$0xff] %v1064
    %1193 = vst [vmem:[#allocation5 + $0x48] sm:$0xff] %v1065
    %1194 = vst [vmem:[#allocation5 + $0x50] sm:$0xff] %v1066
    %1195 = vst [vmem:[#allocation5 + $0x58] sm:$0xff] %v1067
    %1196 = vst [vmem:[#allocation5 + $0x60] sm:$0xff] %v1068
    %1197 = vst [vmem:[#allocation5 + $0x68] sm:$0xff] %v1069
    %1198 = vst [vmem:[#allocation5 + $0x70] sm:$0xff] %v1070
    %1199 = vst [vmem:[#allocation5 + $0x78] sm:$0xff] %v1071
    %1200 = vst [vmem:[#allocation5 + $0x80] sm:$0xff] %v1072
    %1201 = vst [vmem:[#allocation5 + $0x88] sm:$0xff] %v1073
    %1202 = vst [vmem:[#allocation5 + $0x90] sm:$0xff] %v1074
    %1203 = vst [vmem:[#allocation5 + $0x98] sm:$0xff] %v1075
    %1204 = vst [vmem:[#allocation5 + $0xa0] sm:$0xff] %v1076
    %1205 = vst [vmem:[#allocation5 + $0xa8] sm:$0xff] %v1077
    %1206 = vst [vmem:[#allocation5 + $0xb0] sm:$0xff] %v1078
    %1207 = vst [vmem:[#allocation5 + $0xb8] sm:$0xff] %v1079
    %1208 = vst [vmem:[#allocation5 + $0xc0] sm:$0xff] %v1080
    %1209 = vst [vmem:[#allocation5 + $0xc8] sm:$0xff] %v1081
    %1210 = vst [vmem:[#allocation5 + $0xd0] sm:$0xff] %v1082
    %1211 = vst [vmem:[#allocation5 + $0xd8] sm:$0xff] %v1083
    %1212 = vst [vmem:[#allocation5 + $0xe0] sm:$0xff] %v1084
    %1213 = vst [vmem:[#allocation5 + $0xe8] sm:$0xff] %v1085
    %1214 = vst [vmem:[#allocation5 + $0xf0] sm:$0xff] %v1086
    %1215 = vst [vmem:[#allocation5 + $0xf8] sm:$0xff] %v1087
    %1216 = vst [vmem:[#allocation5 + $0x100] sm:$0xff] %v1088
    %1217 = vst [vmem:[#allocation5 + $0x108] sm:$0xff] %v1089
    %1218 = vst [vmem:[#allocation5 + $0x110] sm:$0xff] %v1090
    %1219 = vst [vmem:[#allocation5 + $0x118] sm:$0xff] %v1091
    %1220 = vst [vmem:[#allocation5 + $0x120] sm:$0xff] %v1092
    %1221 = vst [vmem:[#allocation5 + $0x128] sm:$0xff] %v1093
    %1222 = vst [vmem:[#allocation5 + $0x130] sm:$0xff] %v1094
    %1223 = vst [vmem:[#allocation5 + $0x138] sm:$0xff] %v1095
    %1224 = vst [vmem:[#allocation5 + $0x140] sm:$0xff] %v1096
    %1225 = vst [vmem:[#allocation5 + $0x148] sm:$0xff] %v1097
    %1226 = vst [vmem:[#allocation5 + $0x150] sm:$0xff] %v1098
    %1227 = vst [vmem:[#allocation5 + $0x158] sm:$0xff] %v1099
    %1228 = vst [vmem:[#allocation5 + $0x160] sm:$0xff] %v1100
    %1229 = vst [vmem:[#allocation5 + $0x168] sm:$0xff] %v1101
    %1230 = vst [vmem:[#allocation5 + $0x170] sm:$0xff] %v1102
    %1231 = vst [vmem:[#allocation5 + $0x178] sm:$0xff] %v1103
    %1232 = vst [vmem:[#allocation5 + $0x180] sm:$0xff] %v1104
    %1233 = vst [vmem:[#allocation5 + $0x188] sm:$0xff] %v1105
    %1234 = vst [vmem:[#allocation5 + $0x190] sm:$0xff] %v1106
    %1235 = vst [vmem:[#allocation5 + $0x198] sm:$0xff] %v1107
    %1236 = vst [vmem:[#allocation5 + $0x1a0] sm:$0xff] %v1108
    %1237 = vst [vmem:[#allocation5 + $0x1a8] sm:$0xff] %v1109
    %1238 = vst [vmem:[#allocation5 + $0x1b0] sm:$0xff] %v1110
    %1239 = vst [vmem:[#allocation5 + $0x1b8] sm:$0xff] %v1111
    %1240 = vst [vmem:[#allocation5 + $0x1c0] sm:$0xff] %v1112
    %1241 = vst [vmem:[#allocation5 + $0x1c8] sm:$0xff] %v1113
    %1242 = vst [vmem:[#allocation5 + $0x1d0] sm:$0xff] %v1114
    %1243 = vst [vmem:[#allocation5 + $0x1d8] sm:$0xff] %v1115
    %1244 = vst [vmem:[#allocation5 + $0x1e0] sm:$0xff] %v1116
    %1245 = vst [vmem:[#allocation5 + $0x1e8] sm:$0xff] %v1117
    %1246 = vst [vmem:[#allocation5 + $0x1f0] sm:$0xff] %v1118
    %1247 = vst [vmem:[#allocation5 + $0x1f8] sm:$0xff] %v1119
    %1248 = vst [vmem:[#allocation5 + $0x200] sm:$0xff] %v1120
    %1249 = vst [vmem:[#allocation5 + $0x208] sm:$0xff] %v1121
    %1250 = vst [vmem:[#allocation5 + $0x210] sm:$0xff] %v1122
    %1251 = vst [vmem:[#allocation5 + $0x218] sm:$0xff] %v1123
    %1252 = vst [vmem:[#allocation5 + $0x220] sm:$0xff] %v1124
    %1253 = vst [vmem:[#allocation5 + $0x228] sm:$0xff] %v1125
    %1254 = vst [vmem:[#allocation5 + $0x230] sm:$0xff] %v1126
    %1255 = vst [vmem:[#allocation5 + $0x238] sm:$0xff] %v1127
    %1256 = vst [vmem:[#allocation5 + $0x240] sm:$0xff] %v1128
    %1257 = vst [vmem:[#allocation5 + $0x248] sm:$0xff] %v1129
    %1258 = vst [vmem:[#allocation5 + $0x250] sm:$0xff] %v1130
    %1259 = vst [vmem:[#allocation5 + $0x258] sm:$0xff] %v1131
    %1260 = vst [vmem:[#allocation5 + $0x260] sm:$0xff] %v1132
    %1261 = vst [vmem:[#allocation5 + $0x268] sm:$0xff] %v1133
    %1262 = vst [vmem:[#allocation5 + $0x270] sm:$0xff] %v1134
    %1263 = vst [vmem:[#allocation5 + $0x278] sm:$0xff] %v1135
    %1264 = vst [vmem:[#allocation5 + $0x280] sm:$0xff] %v1136
    %1265 = vst [vmem:[#allocation5 + $0x288] sm:$0xff] %v1137
    %1266 = vst [vmem:[#allocation5 + $0x290] sm:$0xff] %v1138
    %1267 = vst [vmem:[#allocation5 + $0x298] sm:$0xff] %v1139
    %1268 = vst [vmem:[#allocation5 + $0x2a0] sm:$0xff] %v1140
    %1269 = vst [vmem:[#allocation5 + $0x2a8] sm:$0xff] %v1141
    %1270 = vst [vmem:[#allocation5 + $0x2b0] sm:$0xff] %v1142
    %1271 = vst [vmem:[#allocation5 + $0x2b8] sm:$0xff] %v1143
    %1272 = vst [vmem:[#allocation5 + $0x2c0] sm:$0xff] %v1144
    %1273 = vst [vmem:[#allocation5 + $0x2c8] sm:$0xff] %v1145
    %1274 = vst [vmem:[#allocation5 + $0x2d0] sm:$0xff] %v1146
    %1275 = vst [vmem:[#allocation5 + $0x2d8] sm:$0xff] %v1147
    %1276 = vst [vmem:[#allocation5 + $0x2e0] sm:$0xff] %v1148
    %1277 = vst [vmem:[#allocation5 + $0x2e8] sm:$0xff] %v1149
    %1278 = vst [vmem:[#allocation5 + $0x2f0] sm:$0xff] %v1150
    %1279 = vst [vmem:[#allocation5 + $0x2f8] sm:$0xff] %v1151
    %1280 = vst [vmem:[#allocation5 + $0x300] sm:$0xff] %v1152
    %1281 = vst [vmem:[#allocation5 + $0x308] sm:$0xff] %v1153
    %1282 = vst [vmem:[#allocation5 + $0x310] sm:$0xff] %v1154
    %1283 = vst [vmem:[#allocation5 + $0x318] sm:$0xff] %v1155
    %1284 = vst [vmem:[#allocation5 + $0x320] sm:$0xff] %v1156
    %1285 = vst [vmem:[#allocation5 + $0x328] sm:$0xff] %v1157
    %1286 = vst [vmem:[#allocation5 + $0x330] sm:$0xff] %v1158
    %1287 = vst [vmem:[#allocation5 + $0x338] sm:$0xff] %v1159
    %1288 = vst [vmem:[#allocation5 + $0x340] sm:$0xff] %v1160
    %1289 = vst [vmem:[#allocation5 + $0x348] sm:$0xff] %v1161
    %1290 = vst [vmem:[#allocation5 + $0x350] sm:$0xff] %v1162
    %1291 = vst [vmem:[#allocation5 + $0x358] sm:$0xff] %v1163
    %1292 = vst [vmem:[#allocation5 + $0x360] sm:$0xff] %v1164
    %1293 = vst [vmem:[#allocation5 + $0x368] sm:$0xff] %v1165
    %1294 = vst [vmem:[#allocation5 + $0x370] sm:$0xff] %v1166
    %1295 = vst [vmem:[#allocation5 + $0x378] sm:$0xff] %v1167
    %1296 = vst [vmem:[#allocation5 + $0x380] sm:$0xff] %v1168
    %1297 = vst [vmem:[#allocation5 + $0x388] sm:$0xff] %v1169
    %1298 = vst [vmem:[#allocation5 + $0x390] sm:$0xff] %v1170
    %1299 = vst [vmem:[#allocation5 + $0x398] sm:$0xff] %v1171
    %1300 = vst [vmem:[#allocation5 + $0x3a0] sm:$0xff] %v1172
    %1301 = vst [vmem:[#allocation5 + $0x3a8] sm:$0xff] %v1173
    %1302 = vst [vmem:[#allocation5 + $0x3b0] sm:$0xff] %v1174
    %1303 = vst [vmem:[#allocation5 + $0x3b8] sm:$0xff] %v1175
    %1304 = vst [vmem:[#allocation5 + $0x3c0] sm:$0xff] %v1176
    %1305 = vst [vmem:[#allocation5 + $0x3c8] sm:$0xff] %v1177
    %1306 = vst [vmem:[#allocation5 + $0x3d0] sm:$0xff] %v1178
    %1307 = vst [vmem:[#allocation5 + $0x3d8] sm:$0xff] %v1179
    %1308 = vst [vmem:[#allocation5 + $0x3e0] sm:$0xff] %v1180
    %1309 = vst [vmem:[#allocation5 + $0x3e8] sm:$0xff] %v1181
    %1310 = vst [vmem:[#allocation5 + $0x3f0] sm:$0xff] %v1182
    %1311 = vst [vmem:[#allocation5 + $0x3f8] sm:$0xff] %v1183
    // Predicated region
    $region10: #{tpu_custom_call.1} parent=1 // pred_check
      _
    $region11: #{tpu_custom_call.1} parent=1 // pred_check_branch
      %1313 = sbr.rel (0) target = $region13
    $region12: #{tpu_custom_call.1} parent=1 // pred_region
      %1315 = vsyncadd [#allocation4], 0
      %s1316 = sshll.u32 [#allocation5], 4
      %s1317 = int_to_ptr.vmem [resolvable:$true] %s1316
      %s1318 = sshll.u32 %s1, 4
      %s1319 = int_to_ptr.hbm [resolvable:$true] %s1318
      %1324 = dma.vmem_to_hbm [thread:$0]  %s1317, 16384, %s1319, [#allocation4], 128, 128, 8
    $region13: #{tpu_custom_call.1} parent=1 // pred_fallthru
      _
    // Predicated region
    $region14: #{tpu_custom_call.1} parent=1 // pred_check
      _
    $region15: #{tpu_custom_call.1} parent=1 // pred_check_branch
      %1326 = sbr.rel (0) target = $region17
    $region16: #{tpu_custom_call.1} parent=1 // pred_region
      %1328 = dma.done [#allocation4], 16384
    $region17: #{tpu_custom_call.1} parent=1 // pred_fallthru
      _
    %1329 = vsyncpa [#allocation3], 1
    %1330 = vsyncpa [#allocation4], 1

</llo_original>
